<compile_context>
chip_gen: v7x
topology: tpu7x:2x2x1
jax: 0.10.0
libtpu: 0.0.40
codegen_flags: <defaults>
</compile_context>

<pallas_src>
import math
import jax
import jax.numpy as jnp
from jax.experimental import pallas as pl
from jax.experimental.pallas import tpu as pltpu


def _discriminator_kernel(x_ref, xt_ref, w1a_ref, w1b_ref, b1_ref, w2_ref,
                          b2_ref, out_ref):
    # x_ref/xt_ref: [TB, D]  w1a_ref/w1b_ref: [D, 4D]  b1_ref/w2_ref: [1, 4D]
    # b2_ref: SMEM [1]       out_ref: [TB, 1]
    # Fused concat: concat([x, x_tild], -1) @ W1 == x @ W1a + x_tild @ W1b.
    h = jnp.dot(x_ref[...], w1a_ref[...], preferred_element_type=jnp.float32)
    h = h + jnp.dot(xt_ref[...], w1b_ref[...], preferred_element_type=jnp.float32)
    h = jnp.maximum(h + b1_ref[...].astype(jnp.float32), 0.0)   # bias + ReLU in f32
    # TODO(synk): Dropout(0.5) is identity in eval/inference mode; training-mode
    # dropout would need pltpu.prng_seed + pltpu.prng_random_bits masking + 2x rescale.
    # Second layer has N=1: VPU multiply + lane reduction keeps the MXU free.
    o = jnp.sum(h * w2_ref[...].astype(jnp.float32), axis=-1, keepdims=True)
    out_ref[...] = (o + b2_ref[0]).astype(out_ref.dtype)


def _round_up(n: int, m: int) -> int:
    return ((n + m - 1) // m) * m


def discriminator_forward(x, x_tild, params, *, tile_b=None,
                          single_buffer_weights=False):
    """Pallas TPU implementation of Discriminator.forward (eval mode).

    x, x_tild : [B, D] float32 or bfloat16
    params    : dict with w1a [D,4D], w1b [D,4D], b1 [4D], w2 [4D], b2 [1]
                (PyTorch W1 stored transposed and split along its input axis so
                 the concat can be fused away).
    returns   : [B, 1] float32 logits.

    Note: at tiny sizes (e.g. B=8, D=32) the call is dominated by fixed grid /
    DMA overhead (~0.35 us per step); batch many rows per call for utilization.
    """
    B, D = x.shape
    assert x_tild.shape == (B, D)
    w1a, w1b = params["w1a"], params["w1b"]
    H = w1a.shape[1]                                    # 4 * D
    assert w1a.shape == (D, H) and w1b.shape == (D, H)
    b1 = params["b1"].reshape(1, H)
    w2 = params["w2"].reshape(1, H)
    b2 = params["b2"].reshape(1).astype(jnp.float32)    # scalar -> SMEM, keep f32

    # Batch tile: multiple of 8 (f32 sublane); 512 is the measured HBM-roofline
    # sweet spot. A real multi-step grid enables pipelining + v7x dual-core.
    if tile_b is None:
        tile_b = min(512, _round_up(B, 8))
    tile_b = max(8, _round_up(tile_b, 8))
    grid = (pl.cdiv(B, tile_b),)

    def _weight_spec(shape):
        if single_buffer_weights:
            # Block index never changes -> one VMEM buffer is enough (halves
            # resident weight footprint; matters for very large D on v7x).
            return pl.BlockSpec(shape, lambda i: (0, 0),
                                pipeline_mode=pl.Buffered(1))
        return pl.BlockSpec(shape, lambda i: (0, 0))

    act_item = x.dtype.itemsize
    w_item = w1a.dtype.itemsize
    n_wbuf = 1 if single_buffer_weights else 2
    vmem_est = (2 * 2 * tile_b * D * act_item          # x, x_tild (double-buffered)
                + n_wbuf * 2 * D * H * w_item          # W1a, W1b (resident)
                + n_wbuf * 2 * H * w_item              # b1, w2 rows
                + 2 * tile_b * 4                       # out tile
                + 2 * tile_b * H * 4)                  # h + f32 temporaries
    # >= 32 MiB fixes v5e's 16 MiB default scoped limit; <= 64 MiB legal on v7x.
    vmem_limit = int(min(max(2 * vmem_est, 32 * 1024 * 1024), 64 * 1024 * 1024))

    cost = pl.CostEstimate(
        flops=int(2 * B * (2 * D) * H + 2 * B * H),
        transcendentals=0,
        bytes_accessed=int(2 * B * D * act_item            # x, x_tild
                           + (2 * D * H + 2 * H) * w_item  # weights + biases
                           + 4                             # b2
                           + B * 4),                       # output
    )

    out = pl.pallas_call(
        _discriminator_kernel,
        out_shape=jax.ShapeDtypeStruct((B, 1), jnp.float32),
        grid_spec=pltpu.PrefetchScalarGridSpec(
            num_scalar_prefetch=0,
            grid=grid,
            in_specs=[
                pl.BlockSpec((tile_b, D), lambda i: (i, 0)),         # x tile
                pl.BlockSpec((tile_b, D), lambda i: (i, 0)),         # x_tild tile
                _weight_spec((D, H)),                                # W1a (resident)
                _weight_spec((D, H)),                                # W1b (resident)
                _weight_spec((1, H)),                                # b1
                _weight_spec((1, H)),                                # w2 as a row
                pl.BlockSpec(memory_space=pltpu.MemorySpace.SMEM),   # b2 scalar
            ],
            out_specs=pl.BlockSpec((tile_b, 1), lambda i: (i, 0)),
        ),
        compiler_params=pltpu.CompilerParams(
            dimension_semantics=("parallel",),
            vmem_limit_bytes=vmem_limit,
        ),
        cost_estimate=cost,
    )(x, x_tild, w1a, w1b, b1, w2, b2)
    return out


def init_discriminator_params(input_size, key):
    """Xavier-uniform weights + PyTorch-default uniform biases.

    PyTorch Linear stores weight as [out, in]; we store the transposed
    [in, out] layout, with W1 split along its input axis into the x half
    (w1a) and the x_tild half (w1b) so the kernel can fuse the concat.
    """
    D = input_size
    H = 4 * D
    k1, k2, k3, k4 = jax.random.split(key, 4)

    # Linear(2D -> 4D), xavier_uniform: bound = sqrt(6 / (fan_in + fan_out)).
    bound1 = math.sqrt(6.0 / (2 * D + H))
    w1 = jax.random.uniform(k1, (2 * D, H), jnp.float32, -bound1, bound1)
    # PyTorch default bias init: U(-1/sqrt(fan_in), 1/sqrt(fan_in)).
    bb1 = 1.0 / math.sqrt(2 * D)
    b1 = jax.random.uniform(k2, (H,), jnp.float32, -bb1, bb1)

    # Linear(4D -> 1), xavier_uniform.
    bound2 = math.sqrt(6.0 / (H + 1))
    w2 = jax.random.uniform(k3, (H,), jnp.float32, -bound2, bound2)
    bb2 = 1.0 / math.sqrt(H)
    b2 = jax.random.uniform(k4, (1,), jnp.float32, -bb2, bb2)

    return {"w1a": w1[:D], "w1b": w1[D:], "b1": b1, "w2": w2, "b2": b2}


def _reference_forward(x, x_tild, params):
    w1 = jnp.concatenate([params["w1a"], params["w1b"]], axis=0)
    x_all = jnp.concatenate([x, x_tild], axis=-1)
    h = jnp.maximum(
        jnp.dot(x_all, w1, precision=jax.lax.Precision.HIGHEST) + params["b1"], 0.0)
    return jnp.dot(h, params["w2"][:, None],
                   precision=jax.lax.Precision.HIGHEST) + params["b2"]


if __name__ == "__main__":
    key = jax.random.PRNGKey(0)
    k_small, k_large = jax.random.split(key)

    # --- small smoke test (representation size D, tiny batch) ---
    B, D = 8, 32
    kx, kxt, kp = jax.random.split(k_small, 3)
    x = jax.random.normal(kx, (B, D), jnp.float32)
    x_tild = jax.random.normal(kxt, (B, D), jnp.float32)
    params = init_discriminator_params(D, kp)

    out = jax.block_until_ready(discriminator_forward(x, x_tild, params))
    ref = _reference_forward(x, x_tild, params)
    assert out.shape == (B, 1), out.shape
    assert jnp.allclose(out, ref, atol=1e-4, rtol=1e-4), (out, ref)

    # --- multi-step grid + partial last block (exercises the tiled fast path) ---
    B2, D2 = 1040, 64                       # 3 grid steps of 512 rows (last partial)
    kx2, kxt2, kp2 = jax.random.split(k_large, 3)
    x2 = jax.random.normal(kx2, (B2, D2), jnp.float32)
    xt2 = jax.random.normal(kxt2, (B2, D2), jnp.float32)
    p2 = init_discriminator_params(D2, kp2)

    out2 = jax.block_until_ready(discriminator_forward(x2, xt2, p2, tile_b=512))
    ref2 = _reference_forward(x2, xt2, p2)
    assert out2.shape == (B2, 1), out2.shape
    assert jnp.allclose(out2, ref2, atol=1e-4, rtol=1e-4)

    # --- bf16 storage (halves HBM traffic on v6e/v7x); accumulation stays f32 ---
    x2b = x2.astype(jnp.bfloat16)
    xt2b = xt2.astype(jnp.bfloat16)
    p2b = {k: v.astype(jnp.bfloat16) for k, v in p2.items()}
    out_bf16 = jax.block_until_ready(discriminator_forward(x2b, xt2b, p2b, tile_b=512))
    assert out_bf16.shape == (B2, 1)
    assert jnp.allclose(out_bf16, ref2, atol=0.2, rtol=0.05)

    # --- single-buffered weights path (VMEM-footprint option for large D) ---
    out_sb = jax.block_until_ready(
        discriminator_forward(x2, xt2, p2, tile_b=512, single_buffer_weights=True))
    assert jnp.allclose(out_sb, ref2, atol=1e-4, rtol=1e-4)

    print("KERNEL_OK")
</pallas_src>

<mosaic_0001>
module attributes {stable_mosaic.version = 11 : i64} {
  func.func @_discriminator_kernel(%arg0: i32, %arg1: memref<8x32xf32, #tpu.memory_space<vmem>>, %arg2: memref<8x32xf32, #tpu.memory_space<vmem>>, %arg3: memref<32x128xf32, #tpu.memory_space<vmem>>, %arg4: memref<32x128xf32, #tpu.memory_space<vmem>>, %arg5: memref<1x128xf32, #tpu.memory_space<vmem>>, %arg6: memref<1x128xf32, #tpu.memory_space<vmem>>, %arg7: memref<1xf32, #tpu.memory_space<smem>>, %arg8: memref<8x1xf32, #tpu.memory_space<vmem>>) attributes {dimension_semantics = [#tpu.dimension_semantics<parallel>], iteration_bounds = array<i64: 1>, scalar_prefetch = 0 : i64, scratch_operands = 0 : i64, tpu.core_type = #tpu.core_type<tc>, window_params = [{transform_indices = @transform_0, window_bounds = array<i64: 8, 32>}, {transform_indices = @transform_1, window_bounds = array<i64: 8, 32>}, {pipeline_mode = #tpu.pipeline_mode<synchronous>, transform_indices = @transform_2, window_bounds = array<i64: 32, 128>}, {pipeline_mode = #tpu.pipeline_mode<synchronous>, transform_indices = @transform_3, window_bounds = array<i64: 32, 128>}, {pipeline_mode = #tpu.pipeline_mode<synchronous>, transform_indices = @transform_4, window_bounds = array<i64: 1, 128>}, {pipeline_mode = #tpu.pipeline_mode<synchronous>, transform_indices = @transform_5, window_bounds = array<i64: 1, 128>}, {transform_indices = @transform_6, window_bounds = array<i64: 1>}, {transform_indices = @transform_7, window_bounds = array<i64: 8, 1>}]} {
    %c0 = arith.constant 0 : index
    %c0_0 = arith.constant 0 : index
    %0 = vector.load %arg1[%c0, %c0_0] : memref<8x32xf32, #tpu.memory_space<vmem>>, vector<8x32xf32>
    %c0_1 = arith.constant 0 : index
    %c0_2 = arith.constant 0 : index
    %1 = vector.load %arg3[%c0_1, %c0_2] : memref<32x128xf32, #tpu.memory_space<vmem>>, vector<32x128xf32>
    %cst = arith.constant dense<0.000000e+00> : vector<8x128xf32>
    %2 = tpu.matmul %0, %1, %cst {dimension_numbers = #tpu.dot_dimension_numbers<[1], [0], [0], [1], [0, 0, 1, 1], [], []>} : vector<8x32xf32>, vector<32x128xf32>, vector<8x128xf32> -> vector<8x128xf32>
    %c0_3 = arith.constant 0 : index
    %c0_4 = arith.constant 0 : index
    %3 = vector.load %arg2[%c0_3, %c0_4] : memref<8x32xf32, #tpu.memory_space<vmem>>, vector<8x32xf32>
    %c0_5 = arith.constant 0 : index
    %c0_6 = arith.constant 0 : index
    %4 = vector.load %arg4[%c0_5, %c0_6] : memref<32x128xf32, #tpu.memory_space<vmem>>, vector<32x128xf32>
    %cst_7 = arith.constant dense<0.000000e+00> : vector<8x128xf32>
    %5 = tpu.matmul %3, %4, %cst_7 {dimension_numbers = #tpu.dot_dimension_numbers<[1], [0], [0], [1], [0, 0, 1, 1], [], []>} : vector<8x32xf32>, vector<32x128xf32>, vector<8x128xf32> -> vector<8x128xf32>
    %6 = arith.addf %2, %5 : vector<8x128xf32>
    %c0_8 = arith.constant 0 : index
    %c0_9 = arith.constant 0 : index
    %7 = vector.load %arg5[%c0_8, %c0_9] : memref<1x128xf32, #tpu.memory_space<vmem>>, vector<1x128xf32>
    %8 = vector.broadcast %7 : vector<1x128xf32> to vector<8x128xf32>
    %9 = arith.addf %6, %8 : vector<8x128xf32>
    %cst_10 = arith.constant 0.000000e+00 : f32
    %10 = vector.broadcast %cst_10 : f32 to vector<8x128xf32>
    %11 = arith.maximumf %9, %10 : vector<8x128xf32>
    %c0_11 = arith.constant 0 : index
    %c0_12 = arith.constant 0 : index
    %12 = vector.load %arg6[%c0_11, %c0_12] : memref<1x128xf32, #tpu.memory_space<vmem>>, vector<1x128xf32>
    %13 = vector.broadcast %12 : vector<1x128xf32> to vector<8x128xf32>
    %14 = arith.mulf %11, %13 : vector<8x128xf32>
    %cst_13 = arith.constant dense<0.000000e+00> : vector<8xf32>
    %15 = vector.multi_reduction <add>, %14, %cst_13 [1] : vector<8x128xf32> to vector<8xf32>
    %16 = vector.shape_cast %15 : vector<8xf32> to vector<8x1xf32>
    %c0_14 = arith.constant 0 : index
    %17 = memref.load %arg7[%c0_14] : memref<1xf32, #tpu.memory_space<smem>>
    %18 = vector.broadcast %17 : f32 to vector<8x1xf32>
    %19 = arith.addf %16, %18 : vector<8x1xf32>
    %c0_15 = arith.constant 0 : index
    %c0_16 = arith.constant 0 : index
    %20 = vector.load %arg8[%c0_15, %c0_16] : memref<8x1xf32, #tpu.memory_space<vmem>>, vector<8x1xf32>
    tpu.vector_store %arg8[%c0_15, %c0_16], %19 {strides = array<i32>} : memref<8x1xf32, #tpu.memory_space<vmem>>, vector<8x1xf32>,
    return
  }
  func.func @transform_0(%arg0: i32) -> (i32, i32) {
    %c0_i32 = arith.constant 0 : i32
    %c0_i32_0 = arith.constant 0 : i32
    return %arg0, %c0_i32 : i32, i32
  }
  func.func @transform_1(%arg0: i32) -> (i32, i32) {
    %c0_i32 = arith.constant 0 : i32
    %c0_i32_0 = arith.constant 0 : i32
    return %arg0, %c0_i32 : i32, i32
  }
  func.func @transform_2(%arg0: i32) -> (i32, i32) {
    %c0_i32 = arith.constant 0 : i32
    %c0_i32_0 = arith.constant 0 : i32
    %c0_i32_1 = arith.constant 0 : i32
    return %c0_i32, %c0_i32_0 : i32, i32
  }
  func.func @transform_3(%arg0: i32) -> (i32, i32) {
    %c0_i32 = arith.constant 0 : i32
    %c0_i32_0 = arith.constant 0 : i32
    %c0_i32_1 = arith.constant 0 : i32
    return %c0_i32, %c0_i32_0 : i32, i32
  }
  func.func @transform_4(%arg0: i32) -> (i32, i32) {
    %c0_i32 = arith.constant 0 : i32
    %c0_i32_0 = arith.constant 0 : i32
    %c0_i32_1 = arith.constant 0 : i32
    return %c0_i32, %c0_i32_0 : i32, i32
  }
  func.func @transform_5(%arg0: i32) -> (i32, i32) {
    %c0_i32 = arith.constant 0 : i32
    %c0_i32_0 = arith.constant 0 : i32
    %c0_i32_1 = arith.constant 0 : i32
    return %c0_i32, %c0_i32_0 : i32, i32
  }
  func.func @transform_6(%arg0: i32) -> i32 {
    %c0_i32 = arith.constant 0 : i32
    %c0_i32_0 = arith.constant 0 : i32
    return %c0_i32 : i32
  }
  func.func @transform_7(%arg0: i32) -> (i32, i32) {
    %c0_i32 = arith.constant 0 : i32
    %c0_i32_0 = arith.constant 0 : i32
    return %arg0, %c0_i32 : i32, i32
  }
}

</mosaic_0001>

<llo_original>
// kernel: tpu_custom_call.1
$region0: #{tpu_custom_call.1}
  #allocation0 [shape = 'u32[]', space=smem, size = 0x4, offset = 0x4, fixed_abs, tag = 'smem constant byte address 0x4 - core index']
  #allocation1 [shape = 'u32[144,128]{1,0:T(1,128)}', space=vmem, size = 0x12000, scoped, tag = 'internal scratch']
  #allocation2 [shape = 'f32[1]{0:T(128)S(6)}', space=smem, size = 0x200, scoped, tag = 'scoped memory for tpu_custom_call.1']
  %s0 = inlined_call_operand.hbm [shape: f32[8,32], index: 0, kind: input, shape index: {}]
  %s1 = inlined_call_operand.hbm [shape: f32[8,32], index: 1, kind: input, shape index: {}]
  %s2 = inlined_call_operand.hbm [shape: f32[32,128], index: 2, kind: input, shape index: {}]
  %s3 = inlined_call_operand.hbm [shape: f32[32,128], index: 3, kind: input, shape index: {}]
  %s4 = inlined_call_operand.vmem [shape: f32[1,128], index: 4, kind: input, shape index: {}]
  %s5 = inlined_call_operand.vmem [shape: f32[1,128], index: 5, kind: input, shape index: {}]
  %s6 = inlined_call_operand.<no memory space> [shape: f32[1], index: 6, kind: input, shape index: {}]
  %s7 = inlined_call_operand.vmem [shape: f32[8,1], index: 7, kind: output, shape index: {}]
  %s8 = sld [smem:[#allocation0]]
  $region54: #{tpu_custom_call.1} parent=0
    _
  %s10 = ssub.s32 1, %s8
  %s11 = scalar_select 0, %s10, %s8
  %12 = sst [smem:[#allocation2]] %s6
  $region1: #{tpu_custom_call.1} parent=0
    #allocation3 [shape = 'u8[4096]{0}', space=vmem, size = 0x1000, scoped, tag = 'input window, operand 0, single buffered']
    #allocation4 [shape = 's32[1]{0}', space=sflag, size = 0x4, scoped, tag = 'scoped memory for tpu_custom_call.1']
    #allocation5 [shape = 'u8[4096]{0}', space=vmem, size = 0x1000, scoped, tag = 'input window, operand 1, single buffered']
    #allocation6 [shape = 's32[1]{0}', space=sflag, size = 0x4, scoped, tag = 'scoped memory for tpu_custom_call.1']
    #allocation7 [shape = 'u8[16384]{0}', space=vmem, size = 0x4000, scoped, tag = 'input window, operand 2, single buffered']
    #allocation8 [shape = 'u8[16384]{0}', space=vmem, size = 0x4000, scoped, tag = 'input window, operand 3, single buffered']
    #allocation9 [shape = 's32[1]{0}', space=sflag, size = 0x4, scoped, tag = 'scoped memory for tpu_custom_call.1']
    %13 = vsyncpa [#allocation4], 0
    %14 = vsyncpa [#allocation6], 0
    %15 = vsyncpa [#allocation9], 0
    // Predicated region
    $region2: #{tpu_custom_call.1} parent=1 // pred_check
      _
    $region3: #{tpu_custom_call.1} parent=1 // pred_check_branch
      %17 = sbr.rel (0) target = $region5
    $region4: #{tpu_custom_call.1} parent=1 // pred_region
      %s19 = ssub.s32 128, 128
      %20 = vsyncadd [#allocation4], %s19
      %s22 = sshll.u32 [#allocation3], 4
      %s23 = int_to_ptr.vmem [resolvable:$true] %s22
      %25 = dma.hbm_to_vmem [thread:$0]  %s0, 128, %s23, [#allocation4]
    $region5: #{tpu_custom_call.1} parent=1 // pred_fallthru
      _
    // Predicated region
    $region6: #{tpu_custom_call.1} parent=1 // pred_check
      _
    $region7: #{tpu_custom_call.1} parent=1 // pred_check_branch
      %27 = sbr.rel (0) target = $region9
    $region8: #{tpu_custom_call.1} parent=1 // pred_region
      %s29 = ssub.s32 128, 128
      %30 = vsyncadd [#allocation6], %s29
      %s32 = sshll.u32 [#allocation5], 4
      %s33 = int_to_ptr.vmem [resolvable:$true] %s32
      %35 = dma.hbm_to_vmem [thread:$0]  %s1, 128, %s33, [#allocation6]
    $region9: #{tpu_custom_call.1} parent=1 // pred_fallthru
      _
    // Predicated region
    $region10: #{tpu_custom_call.1} parent=1 // pred_check
      _
    $region11: #{tpu_custom_call.1} parent=1 // pred_check_branch
      %37 = sbr.rel (0) target = $region13
    $region12: #{tpu_custom_call.1} parent=1 // pred_region
      %s39 = ssub.s32 512, 512
      %40 = vsyncadd [#allocation6], %s39
      %s41 = sshll.u32 [#allocation7], 4
      %s42 = int_to_ptr.vmem [resolvable:$true] %s41
      %47 = dma.hbm_to_vmem [thread:$0]  %s2, 512, %s42, [#allocation6], 128, 128, 8
    $region13: #{tpu_custom_call.1} parent=1 // pred_fallthru
      _
    // Predicated region
    $region14: #{tpu_custom_call.1} parent=1 // pred_check
      _
    $region15: #{tpu_custom_call.1} parent=1 // pred_check_branch
      %49 = sbr.rel (0) target = $region17
    $region16: #{tpu_custom_call.1} parent=1 // pred_region
      %s51 = ssub.s32 512, 512
      %52 = vsyncadd [#allocation9], %s51
      %s53 = sshll.u32 [#allocation8], 4
      %s54 = int_to_ptr.vmem [resolvable:$true] %s53
      %59 = dma.hbm_to_vmem [thread:$0]  %s3, 512, %s54, [#allocation9], 128, 128, 8
    $region17: #{tpu_custom_call.1} parent=1 // pred_fallthru
      _
    // Predicated region
    $region18: #{tpu_custom_call.1} parent=1 // pred_check
      _
    $region19: #{tpu_custom_call.1} parent=1 // pred_check_branch
      %61 = sbr.rel (0) target = $region21
    $region20: #{tpu_custom_call.1} parent=1 // pred_region
      _
    $region21: #{tpu_custom_call.1} parent=1 // pred_fallthru
      _
    // Predicated region
    $region22: #{tpu_custom_call.1} parent=1 // pred_check
      _
    $region23: #{tpu_custom_call.1} parent=1 // pred_check_branch
      %63 = sbr.rel (0) target = $region25
    $region24: #{tpu_custom_call.1} parent=1 // pred_region
      _
    $region25: #{tpu_custom_call.1} parent=1 // pred_fallthru
      _
    // Predicated region
    $region26: #{tpu_custom_call.1} parent=1 // pred_check
      _
    $region27: #{tpu_custom_call.1} parent=1 // pred_check_branch
      %65 = sbr.rel (0) target = $region29
    $region28: #{tpu_custom_call.1} parent=1 // pred_region
      _
    $region29: #{tpu_custom_call.1} parent=1 // pred_fallthru
      _
    // Predicated region
    $region30: #{tpu_custom_call.1} parent=1 // pred_check
      _
    $region31: #{tpu_custom_call.1} parent=1 // pred_check_branch
      %67 = sbr.rel (0) target = $region33
    $region32: #{tpu_custom_call.1} parent=1 // pred_region
      %68 = dma.done [#allocation4], 128
    $region33: #{tpu_custom_call.1} parent=1 // pred_fallthru
      _
    // Predicated region
    $region34: #{tpu_custom_call.1} parent=1 // pred_check
      _
    $region35: #{tpu_custom_call.1} parent=1 // pred_check_branch
      %70 = sbr.rel (0) target = $region37
    $region36: #{tpu_custom_call.1} parent=1 // pred_region
      %71 = dma.done [#allocation6], 128
    $region37: #{tpu_custom_call.1} parent=1 // pred_fallthru
      _
    // Predicated region
    $region38: #{tpu_custom_call.1} parent=1 // pred_check
      _
    $region39: #{tpu_custom_call.1} parent=1 // pred_check_branch
      %73 = sbr.rel (0) target = $region41
    $region40: #{tpu_custom_call.1} parent=1 // pred_region
      %74 = dma.done [#allocation6], 512
    $region41: #{tpu_custom_call.1} parent=1 // pred_fallthru
      _
    // Predicated region
    $region42: #{tpu_custom_call.1} parent=1 // pred_check
      _
    $region43: #{tpu_custom_call.1} parent=1 // pred_check_branch
      %76 = sbr.rel (0) target = $region45
    $region44: #{tpu_custom_call.1} parent=1 // pred_region
      %77 = dma.done [#allocation9], 512
    $region45: #{tpu_custom_call.1} parent=1 // pred_fallthru
      _
    %v78 = vld [vmem:[#allocation3] sm:$0xff]
    %v79 = vld [vmem:[#allocation7] sm:$0xff]
    %v80 = vld [vmem:[#allocation7 + $0x8] sm:$0xff]
    %v81 = vld [vmem:[#allocation7 + $0x10] sm:$0xff]
    %v82 = vld [vmem:[#allocation7 + $0x18] sm:$0xff]
    %v83 = vld [vmem:[#allocation5] sm:$0xff]
    %v84 = vld [vmem:[#allocation8] sm:$0xff]
    %v85 = vld [vmem:[#allocation8 + $0x8] sm:$0xff]
    %v86 = vld [vmem:[#allocation8 + $0x10] sm:$0xff]
    %v87 = vld [vmem:[#allocation8 + $0x18] sm:$0xff]
    %vm88 = vcmask 261120
    %v90 = vsel %vm88, %v83, 0
    %92 = vmatprep.subr.mxu0 0.0
    %93 = vmatpush1.msra.mxu0 %v84
    %94 = vmatprep.subr.mxu0 0.0
    %95 = vmatpush1.msra.mxu0 %v85
    %96 = vmatprep.subr.mxu0 0.0
    %97 = vmatpush1.msra.mxu0 %v86
    %98 = vmatprep.subr.mxu0 0.0
    %99 = vmatpush1.msra.mxu0 %v87
    %100 = vmatprep.subr.mxu0 0.0
    %101 = vmatpush1.msra.mxu0 0.0
    %102 = vmatprep.subr.mxu0 0.0
    %103 = vmatpush1.msra.mxu0 0.0
    %104 = vmatprep.subr.mxu0 0.0
    %105 = vmatpush1.msra.mxu0 0.0
    %106 = vmatprep.subr.mxu0 0.0
    %107 = vmatpush1.msra.mxu0 0.0
    %108 = vmatprep.subr.mxu0 0.0
    %109 = vmatpush1.msra.mxu0 0.0
    %110 = vmatprep.subr.mxu0 0.0
    %111 = vmatpush1.msra.mxu0 0.0
    %112 = vmatprep.subr.mxu0 0.0
    %113 = vmatpush1.msra.mxu0 0.0
    %114 = vmatprep.subr.mxu0 0.0
    %115 = vmatpush1.msra.mxu0 0.0
    %116 = vmatprep.subr.mxu0 0.0
    %117 = vmatpush1.msra.mxu0 0.0
    %118 = vmatprep.subr.mxu0 0.0
    %119 = vmatpush1.msra.mxu0 0.0
    %120 = vmatprep.subr.mxu0 0.0
    %121 = vmatpush1.msra.mxu0 0.0
    %122 = vmatprep.subr.mxu0 0.0
    %123 = vmatpush1.msra.mxu0 0.0
    %124 = vmatprep.subr.mxu0 0.0
    %125 = vmatpush1.msra.mxu0 0.0
    %126 = vmatprep.subr.mxu0 0.0
    %127 = vmatpush1.msra.mxu0 0.0
    %128 = vmatprep.subr.mxu0 0.0
    %129 = vmatpush1.msra.mxu0 0.0
    %130 = vmatprep.subr.mxu0 0.0
    %131 = vmatpush1.msra.mxu0 0.0
    %132 = vmatprep.subr.mxu0 0.0
    %133 = vmatpush1.msra.mxu0 0.0
    %134 = vmatprep.subr.mxu0 0.0
    %135 = vmatpush1.msra.mxu0 0.0
    %136 = vmatprep.subr.mxu0 0.0
    %137 = vmatpush1.msra.mxu0 0.0
    %138 = vmatprep.subr.mxu0 0.0
    %139 = vmatpush1.msra.mxu0 0.0
    %140 = vmatprep.subr.mxu0 0.0
    %141 = vmatpush1.msra.mxu0 0.0
    %142 = vmatprep.subr.mxu0 0.0
    %143 = vmatpush1.msra.mxu0 0.0
    %144 = vmatprep.subr.mxu0 0.0
    %145 = vmatpush1.msra.mxu0 0.0
    %146 = vmatprep.subr.mxu0 0.0
    %147 = vmatpush1.msra.mxu0 0.0
    %148 = vmatprep.subr.mxu0 0.0
    %149 = vmatpush1.msra.mxu0 0.0
    %150 = vmatprep.subr.mxu0 0.0
    %151 = vmatpush1.msra.mxu0 0.0
    %152 = vmatprep.subr.mxu0 0.0
    %153 = vmatpush1.msra.mxu0 0.0
    %154 = vmatprep.subr.mxu0 0.0
    %155 = vmatpush1.msra.mxu0 0.0
    %156 = vmatprep.mubr.f32.mxu0 0.0
    %157 = vmatmul.mubr.f32.gmra.mrb[0].mxu0 %v90
    %v158 = vpop.f32.mrb[0].mxu0
    %v159 = vadd.f32 0.0, %v158
    %v160 = vpop.f32.mrb[0].mxu0
    %161 = vdwg.mxu0
    %v163 = vsel %vm88, %v78, 0
    %165 = vmatprep.subr.mxu0 0.0
    %166 = vmatpush1.msra.mxu0 %v79
    %167 = vmatprep.subr.mxu0 0.0
    %168 = vmatpush1.msra.mxu0 %v80
    %169 = vmatprep.subr.mxu0 0.0
    %170 = vmatpush1.msra.mxu0 %v81
    %171 = vmatprep.subr.mxu0 0.0
    %172 = vmatpush1.msra.mxu0 %v82
    %173 = vmatprep.subr.mxu0 0.0
    %174 = vmatpush1.msra.mxu0 0.0
    %175 = vmatprep.subr.mxu0 0.0
    %176 = vmatpush1.msra.mxu0 0.0
    %177 = vmatprep.subr.mxu0 0.0
    %178 = vmatpush1.msra.mxu0 0.0
    %179 = vmatprep.subr.mxu0 0.0
    %180 = vmatpush1.msra.mxu0 0.0
    %181 = vmatprep.subr.mxu0 0.0
    %182 = vmatpush1.msra.mxu0 0.0
    %183 = vmatprep.subr.mxu0 0.0
    %184 = vmatpush1.msra.mxu0 0.0
    %185 = vmatprep.subr.mxu0 0.0
    %186 = vmatpush1.msra.mxu0 0.0
    %187 = vmatprep.subr.mxu0 0.0
    %188 = vmatpush1.msra.mxu0 0.0
    %189 = vmatprep.subr.mxu0 0.0
    %190 = vmatpush1.msra.mxu0 0.0
    %191 = vmatprep.subr.mxu0 0.0
    %192 = vmatpush1.msra.mxu0 0.0
    %193 = vmatprep.subr.mxu0 0.0
    %194 = vmatpush1.msra.mxu0 0.0
    %195 = vmatprep.subr.mxu0 0.0
    %196 = vmatpush1.msra.mxu0 0.0
    %197 = vmatprep.subr.mxu0 0.0
    %198 = vmatpush1.msra.mxu0 0.0
    %199 = vmatprep.subr.mxu0 0.0
    %200 = vmatpush1.msra.mxu0 0.0
    %201 = vmatprep.subr.mxu0 0.0
    %202 = vmatpush1.msra.mxu0 0.0
    %203 = vmatprep.subr.mxu0 0.0
    %204 = vmatpush1.msra.mxu0 0.0
    %205 = vmatprep.subr.mxu0 0.0
    %206 = vmatpush1.msra.mxu0 0.0
    %207 = vmatprep.subr.mxu0 0.0
    %208 = vmatpush1.msra.mxu0 0.0
    %209 = vmatprep.subr.mxu0 0.0
    %210 = vmatpush1.msra.mxu0 0.0
    %211 = vmatprep.subr.mxu0 0.0
    %212 = vmatpush1.msra.mxu0 0.0
    %213 = vmatprep.subr.mxu0 0.0
    %214 = vmatpush1.msra.mxu0 0.0
    %215 = vmatprep.subr.mxu0 0.0
    %216 = vmatpush1.msra.mxu0 0.0
    %217 = vmatprep.subr.mxu0 0.0
    %218 = vmatpush1.msra.mxu0 0.0
    %219 = vmatprep.subr.mxu0 0.0
    %220 = vmatpush1.msra.mxu0 0.0
    %221 = vmatprep.subr.mxu0 0.0
    %222 = vmatpush1.msra.mxu0 0.0
    %223 = vmatprep.subr.mxu0 0.0
    %224 = vmatpush1.msra.mxu0 0.0
    %225 = vmatprep.subr.mxu0 0.0
    %226 = vmatpush1.msra.mxu0 0.0
    %227 = vmatprep.subr.mxu0 0.0
    %228 = vmatpush1.msra.mxu0 0.0
    %229 = vmatprep.mubr.f32.mxu0 0.0
    %230 = vmatmul.mubr.f32.gmra.mrb[0].mxu0 %v163
    %v231 = vpop.f32.mrb[0].mxu0
    %v232 = vadd.f32 %v159, %v231
    %v233 = vpop.f32.mrb[0].mxu0
    %234 = vdwg.mxu0
    %v235 = vld [vmem:[%s4] sm:$0x1]
    %v237 = vlaneseq
    %v238 = vshrl.u32 %v237, 7
    %v239 = vsub.s32 0, %v238
    %v240 = vrot.slane %v235, %v239
    %v242 = vadd.f32 %v232, %v240
    %v243 = vmax.f32 %v242, 0.0
    %v244 = vld [vmem:[%s5] sm:$0x1]
    %v246 = vlaneseq
    %v247 = vshrl.u32 %v246, 7
    %v248 = vsub.s32 0, %v247
    %v249 = vrot.slane %v244, %v248
    %v251 = vmul.f32 %v243, %v249
    %252 = vadd.xlane.f32.xlu0 %v251
    %v253 = vpop.xlane.xlu0 %252
    %s254 = sld [smem:[#allocation2]]
    %v255 = vstv %s254
    %v256 = vadd.f32 %v253, %v255
    %vm257 = vcmask 7168
    %258 = vst.msk [vmem:[%s7] sm:$0xff] %vm257, %v256
    // Predicated region
    $region46: #{tpu_custom_call.1} parent=1 // pred_check
      _
    $region47: #{tpu_custom_call.1} parent=1 // pred_check_branch
      %260 = sbr.rel (0) target = $region49
    $region48: #{tpu_custom_call.1} parent=1 // pred_region
      _
    $region49: #{tpu_custom_call.1} parent=1 // pred_fallthru
      _
    // Predicated region
    $region50: #{tpu_custom_call.1} parent=1 // pred_check
      _
    $region51: #{tpu_custom_call.1} parent=1 // pred_check_branch
      %262 = sbr.rel (0) target = $region53
    $region52: #{tpu_custom_call.1} parent=1 // pred_region
      _
    $region53: #{tpu_custom_call.1} parent=1 // pred_fallthru
      _
    %263 = vsyncpa [#allocation4], 1
    %264 = vsyncpa [#allocation6], 1
    %265 = vsyncpa [#allocation9], 1

</llo_original>
